<compile_context>
chip_gen: v5e
topology: v5e:2x2
jax: 0.10.0
libtpu: 0.0.40
codegen_flags: <defaults>
</compile_context>

<pallas_src>
import functools

import jax
import jax.numpy as jnp
from jax import lax
from jax.experimental import pallas as pl
from jax.experimental.pallas import tpu as pltpu


def _round_up(x, m):
    return (x + m - 1) // m * m


def _cdiv(a, b):
    return -(-a // b)


def _vmem_budget_bytes():
    """Scoped-VMEM budget with headroom for compiler-internal scratch.

    v7x (64 MiB physical) -> ~54 MiB; v5e/v6e (128 MiB) -> ~108 MiB.
    """
    cap = 64 << 20  # conservative default = v7x per-TensorCore VMEM
    try:
        info = pltpu.get_tpu_info()
        cap_attr = getattr(info, "vmem_capacity_bytes", None)
        if cap_attr:
            cap = int(cap_attr)
    except Exception:
        pass
    return int(min(cap - (8 << 20), cap * 0.85))


def _layer_norm(y, gamma, beta, *, eps, d_in_real, mask_features):
    """LayerNorm over the last axis of an f32 tile.

    When mask_features is True the padded feature columns of y are exactly
    zero by construction (zero-padded x, w2 and b2), so the mean sum is
    already correct; only the centered values need a single masking pass
    before the variance sum.
    """
    inv_n = 1.0 / d_in_real
    mean = jnp.sum(y, axis=-1, keepdims=True) * inv_n
    if mask_features:
        col = lax.broadcasted_iota(jnp.int32, y.shape, 1)
        diff = jnp.where(col < d_in_real, y - mean, 0.0)
    else:
        diff = y - mean
    var = jnp.sum(diff * diff, axis=-1, keepdims=True) * inv_n
    return diff * lax.rsqrt(var + eps) * gamma + beta


def _ffn_fused_kernel(x_ref, w1_ref, b1_ref, w2_ref, b2_ref, g_ref, beta_ref,
                      o_ref, *, eps, d_in_real, mask_features, op_dtype,
                      precision):
    """Whole d_hid resident in VMEM: one grid axis over row tiles only."""
    x = x_ref[...]
    h = jnp.dot(x.astype(op_dtype), w1_ref[...],
                preferred_element_type=jnp.float32, precision=precision)
    h = jnp.maximum(h + b1_ref[...].astype(jnp.float32), 0.0)
    y = jnp.dot(h.astype(w2_ref.dtype), w2_ref[...],
                preferred_element_type=jnp.float32, precision=precision)
    # TODO(synk): dropout omitted (inference / eval-mode identity).
    y = y + b2_ref[...].astype(jnp.float32) + x.astype(jnp.float32)
    out = _layer_norm(y, g_ref[...].astype(jnp.float32),
                      beta_ref[...].astype(jnp.float32),
                      eps=eps, d_in_real=d_in_real,
                      mask_features=mask_features)
    o_ref[...] = out.astype(o_ref.dtype)


def _ffn_ktiled_kernel(x_ref, w1_ref, b1_ref, w2_ref, b2_ref, g_ref, beta_ref,
                       o_ref, acc_ref, *, eps, d_in_real, mask_features,
                       op_dtype, precision):
    """d_hid tiled on a trailing 'arbitrary' reduction axis with f32 scratch."""
    k = pl.program_id(1)

    @pl.when(k == 0)
    def _():
        # Fold residual + b2 into the accumulator init: saves a full-tile
        # zero-store pass and two full-tile VPU adds in the last-k epilogue.
        acc_ref[...] = (x_ref[...].astype(jnp.float32)
                        + b2_ref[...].astype(jnp.float32))

    h = jnp.dot(x_ref[...].astype(op_dtype), w1_ref[...],
                preferred_element_type=jnp.float32, precision=precision)
    h = jnp.maximum(h + b1_ref[...].astype(jnp.float32), 0.0)
    acc_ref[...] += jnp.dot(h.astype(w2_ref.dtype), w2_ref[...],
                            preferred_element_type=jnp.float32,
                            precision=precision)

    @pl.when(k == pl.num_programs(1) - 1)
    def _():
        # TODO(synk): dropout omitted (inference / eval-mode identity).
        out = _layer_norm(acc_ref[...], g_ref[...].astype(jnp.float32),
                          beta_ref[...].astype(jnp.float32),
                          eps=eps, d_in_real=d_in_real,
                          mask_features=mask_features)
        o_ref[...] = out.astype(o_ref.dtype)


def positionwise_feed_forward(x, w1, b1, w2, b2, gamma, beta, *,
                              eps=1e-6, row_tile=512, hid_tile=2048,
                              matmul_dtype=None):
    """Transformer position-wise FFN: LayerNorm(x + W2 relu(W1 x + b1) + b2).

    x: [B, S, d_in]; w1: [d_in, d_hid]; w2: [d_hid, d_in] (nn.Linear weights
    pre-transposed); gamma/beta: LayerNorm affine params.
    matmul_dtype: optional lower-precision dtype (e.g. jnp.bfloat16) used for
    the two matmuls; accumulation and the LN epilogue stay in f32.
    """
    B, S, d_in = x.shape
    d_hid = w1.shape[1]
    rows = B * S
    x_dtype = x.dtype
    op_dtype = (jnp.dtype(matmul_dtype) if matmul_dtype is not None
                else jnp.dtype(x_dtype))
    w_dtype = op_dtype if matmul_dtype is not None else jnp.dtype(w1.dtype)
    x_isz = jnp.dtype(x_dtype).itemsize
    w_isz = jnp.dtype(w_dtype).itemsize
    precision = (lax.Precision.HIGHEST if op_dtype == jnp.dtype(jnp.float32)
                 else lax.Precision.DEFAULT)

    # ---- tile geometry ------------------------------------------------------
    d_in_pad = _round_up(d_in, 128)            # lane-dense output tiles
    mask_features = d_in_pad != d_in

    TM = min(_round_up(row_tile, 8), _round_up(rows, 8))
    # Megacore (v7x has 2 TCs): guarantee >= 2 row tiles when rows allow it.
    if rows > 8 and _cdiv(rows, TM) < 2:
        TM = _round_up(_cdiv(rows, 2), 8)

    budget = _vmem_budget_bytes()

    def est_fused(tm, dh_pad):
        return (2 * 2 * dh_pad * d_in_pad * w_isz          # w1 + w2, dbl-buffered
                + 2 * 2 * tm * d_in_pad * x_isz            # x + out tiles, dbl-buffered
                + 2 * (dh_pad + 3 * d_in_pad) * w_isz      # b1/b2/gamma/beta
                + tm * dh_pad * (4 + w_isz)                # f32 h + matmul-dtype copy
                + 4 * tm * d_in_pad * 4)                   # LN temporaries

    def est_ktiled(tm, th):
        return (2 * 2 * th * d_in_pad * w_isz              # w1/w2 slices
                + 2 * 2 * tm * d_in_pad * x_isz
                + 2 * (th + 3 * d_in_pad) * w_isz
                + tm * d_in_pad * 4                        # f32 accumulator scratch
                + tm * th * (4 + w_isz)
                + 4 * tm * d_in_pad * 4)

    d_hid_pad_full = _round_up(d_hid, 128)
    fused = est_fused(TM, d_hid_pad_full) <= budget
    if fused:
        d_hid_pad = d_hid_pad_full
        TH = d_hid_pad
        est = est_fused(TM, d_hid_pad)
    else:
        TH = min(_round_up(hid_tile, 128), d_hid_pad_full)
        while est_ktiled(TM, TH) > budget and TH > 128:
            TH = max(128, _round_up(TH // 2, 128))
        while est_ktiled(TM, TH) > budget and TM > 8:
            TM = max(8, _round_up(TM // 2, 8))
        d_hid_pad = _round_up(d_hid, TH)
        est = est_ktiled(TM, TH)

    rows_pad = _round_up(rows, TM)
    num_row_tiles = rows_pad // TM

    # ---- operand prep: pad only when actually needed -------------------------
    x2d = x.reshape(rows, d_in)
    padded = (rows_pad != rows) or mask_features
    if padded:
        x2d = jnp.zeros((rows_pad, d_in_pad), x_dtype).at[:rows, :d_in].set(x2d)

    def prep_w(w, shape_pad):
        if matmul_dtype is not None:
            w = w.astype(w_dtype)
        if tuple(w.shape) != shape_pad:
            w = jnp.zeros(shape_pad, w.dtype).at[:w.shape[0], :w.shape[1]].set(w)
        return w

    def prep_v(v, n_pad):
        v = v.reshape(1, -1)
        if v.shape[1] != n_pad:
            v = jnp.zeros((1, n_pad), v.dtype).at[:, :v.shape[1]].set(v)
        return v

    w1p = prep_w(w1, (d_in_pad, d_hid_pad))
    w2p = prep_w(w2, (d_hid_pad, d_in_pad))
    b1p = prep_v(b1, d_hid_pad)
    b2p = prep_v(b2, d_in_pad)
    gp = prep_v(gamma, d_in_pad)
    bp = prep_v(beta, d_in_pad)

    # ---- scheduler hints ------------------------------------------------------
    cost = pl.CostEstimate(
        flops=2 * 2 * rows * d_in * d_hid,
        transcendentals=rows,  # one rsqrt per row (LayerNorm)
        bytes_accessed=int(
            num_row_tiles * 2 * d_in_pad * d_hid_pad * w_isz   # weights re-streamed per row tile
            + 2 * rows_pad * d_in_pad * x_isz                  # x in + out
            + (d_hid_pad + 3 * d_in_pad) * w_isz))             # biases / LN params
    vmem_limit = int(min(budget, max(32 << 20, int(est * 1.25))))

    common = dict(eps=eps, d_in_real=d_in, mask_features=mask_features,
                  op_dtype=op_dtype, precision=precision)

    if fused:
        kernel = functools.partial(_ffn_fused_kernel, **common)
        grid = (num_row_tiles,)
        in_specs = [
            pl.BlockSpec((TM, d_in_pad), lambda i: (i, 0)),     # x tile
            pl.BlockSpec((d_in_pad, TH), lambda i: (0, 0)),     # full w1
            pl.BlockSpec((1, TH), lambda i: (0, 0)),            # b1
            pl.BlockSpec((TH, d_in_pad), lambda i: (0, 0)),     # full w2
            pl.BlockSpec((1, d_in_pad), lambda i: (0, 0)),      # b2
            pl.BlockSpec((1, d_in_pad), lambda i: (0, 0)),      # gamma
            pl.BlockSpec((1, d_in_pad), lambda i: (0, 0)),      # beta
        ]
        out_specs = pl.BlockSpec((TM, d_in_pad), lambda i: (i, 0))
        scratch_shapes = []
        dims = ("parallel",)
    else:
        kernel = functools.partial(_ffn_ktiled_kernel, **common)
        grid = (num_row_tiles, d_hid_pad // TH)
        in_specs = [
            pl.BlockSpec((TM, d_in_pad), lambda i, k: (i, 0)),  # x tile
            pl.BlockSpec((d_in_pad, TH), lambda i, k: (0, k)),  # w1 slice
            pl.BlockSpec((1, TH), lambda i, k: (0, k)),         # b1 slice
            pl.BlockSpec((TH, d_in_pad), lambda i, k: (k, 0)),  # w2 slice
            pl.BlockSpec((1, d_in_pad), lambda i, k: (0, 0)),   # b2
            pl.BlockSpec((1, d_in_pad), lambda i, k: (0, 0)),   # gamma
            pl.BlockSpec((1, d_in_pad), lambda i, k: (0, 0)),   # beta
        ]
        out_specs = pl.BlockSpec((TM, d_in_pad), lambda i, k: (i, 0))
        scratch_shapes = [pltpu.VMEM((TM, d_in_pad), jnp.float32)]
        dims = ("parallel", "arbitrary")

    out2d = pl.pallas_call(
        kernel,
        out_shape=jax.ShapeDtypeStruct((rows_pad, d_in_pad), x_dtype),
        grid_spec=pltpu.PrefetchScalarGridSpec(
            num_scalar_prefetch=0,
            grid=grid,
            in_specs=in_specs,
            out_specs=out_specs,
            scratch_shapes=scratch_shapes),
        compiler_params=pltpu.CompilerParams(
            dimension_semantics=dims,
            vmem_limit_bytes=vmem_limit),
        cost_estimate=cost,
    )(x2d, w1p, b1p, w2p, b2p, gp, bp)

    if padded:
        out2d = out2d[:rows, :d_in]
    return out2d.reshape(B, S, d_in)


def _reference(x, w1, b1, w2, b2, gamma, beta, eps=1e-6):
    xf = x.astype(jnp.float32)
    h = jnp.maximum(xf @ w1 + b1, 0.0)
    y = h @ w2 + b2 + xf
    mean = jnp.mean(y, axis=-1, keepdims=True)
    var = jnp.mean((y - mean) ** 2, axis=-1, keepdims=True)
    return ((y - mean) / jnp.sqrt(var + eps)) * gamma + beta


if __name__ == "__main__":
    key = jax.random.PRNGKey(0)
    B, S, d_in, d_hid = 2, 8, 32, 64

    k_x, k_w1, k_b1, k_w2, k_b2 = jax.random.split(key, 5)
    x = jax.random.normal(k_x, (B, S, d_in), dtype=jnp.float32)

    # Deterministic synthetic params (nn.Linear weights stored pre-transposed).
    w1 = jax.random.normal(k_w1, (d_in, d_hid), dtype=jnp.float32) * 0.1
    b1 = jax.random.normal(k_b1, (d_hid,), dtype=jnp.float32) * 0.1
    w2 = jax.random.normal(k_w2, (d_hid, d_in), dtype=jnp.float32) * 0.1
    b2 = jax.random.normal(k_b2, (d_in,), dtype=jnp.float32) * 0.1
    gamma = jnp.ones((d_in,), dtype=jnp.float32)
    beta = jnp.zeros((d_in,), dtype=jnp.float32)

    out = positionwise_feed_forward(x, w1, b1, w2, b2, gamma, beta)
    out = jax.block_until_ready(out)

    ref = _reference(x, w1, b1, w2, b2, gamma, beta)
    assert out.shape == (B, S, d_in)
    assert jnp.allclose(out, ref, atol=1e-4, rtol=1e-4), "mismatch vs reference"

    print("KERNEL_OK")
</pallas_src>

<mosaic_0001>
module attributes {stable_mosaic.version = 11 : i64} {
  func.func @_ffn_fused_kernel(%arg0: i32, %arg1: memref<8x128xf32, #tpu.memory_space<vmem>>, %arg2: memref<128x128xf32, #tpu.memory_space<vmem>>, %arg3: memref<1x128xf32, #tpu.memory_space<vmem>>, %arg4: memref<128x128xf32, #tpu.memory_space<vmem>>, %arg5: memref<1x128xf32, #tpu.memory_space<vmem>>, %arg6: memref<1x128xf32, #tpu.memory_space<vmem>>, %arg7: memref<1x128xf32, #tpu.memory_space<vmem>>, %arg8: memref<8x128xf32, #tpu.memory_space<vmem>>) attributes {dimension_semantics = [#tpu.dimension_semantics<parallel>], iteration_bounds = array<i64: 2>, scalar_prefetch = 0 : i64, scratch_operands = 0 : i64, tpu.core_type = #tpu.core_type<tc>, window_params = [{transform_indices = @transform_0, window_bounds = array<i64: 8, 128>}, {pipeline_mode = #tpu.pipeline_mode<synchronous>, transform_indices = @transform_1, window_bounds = array<i64: 128, 128>}, {pipeline_mode = #tpu.pipeline_mode<synchronous>, transform_indices = @transform_2, window_bounds = array<i64: 1, 128>}, {pipeline_mode = #tpu.pipeline_mode<synchronous>, transform_indices = @transform_3, window_bounds = array<i64: 128, 128>}, {pipeline_mode = #tpu.pipeline_mode<synchronous>, transform_indices = @transform_4, window_bounds = array<i64: 1, 128>}, {pipeline_mode = #tpu.pipeline_mode<synchronous>, transform_indices = @transform_5, window_bounds = array<i64: 1, 128>}, {pipeline_mode = #tpu.pipeline_mode<synchronous>, transform_indices = @transform_6, window_bounds = array<i64: 1, 128>}, {transform_indices = @transform_7, window_bounds = array<i64: 8, 128>}]} {
    %c0 = arith.constant 0 : index
    %c0_0 = arith.constant 0 : index
    %0 = vector.load %arg1[%c0, %c0_0] : memref<8x128xf32, #tpu.memory_space<vmem>>, vector<8x128xf32>
    %c0_1 = arith.constant 0 : index
    %c0_2 = arith.constant 0 : index
    %1 = vector.load %arg2[%c0_1, %c0_2] : memref<128x128xf32, #tpu.memory_space<vmem>>, vector<128x128xf32>
    %cst = arith.constant dense<0.000000e+00> : vector<8x128xf32>
    %2 = tpu.matmul %0, %1, %cst {dimension_numbers = #tpu.dot_dimension_numbers<[1], [0], [0], [1], [0, 0, 1, 1], [], []>, precision = #tpu.contract_precision<fp32>} : vector<8x128xf32>, vector<128x128xf32>, vector<8x128xf32> -> vector<8x128xf32>
    %c0_3 = arith.constant 0 : index
    %c0_4 = arith.constant 0 : index
    %3 = vector.load %arg3[%c0_3, %c0_4] : memref<1x128xf32, #tpu.memory_space<vmem>>, vector<1x128xf32>
    %4 = vector.broadcast %3 : vector<1x128xf32> to vector<8x128xf32>
    %5 = arith.addf %2, %4 : vector<8x128xf32>
    %cst_5 = arith.constant 0.000000e+00 : f32
    %6 = vector.broadcast %cst_5 : f32 to vector<8x128xf32>
    %7 = arith.maximumf %5, %6 : vector<8x128xf32>
    %c0_6 = arith.constant 0 : index
    %c0_7 = arith.constant 0 : index
    %8 = vector.load %arg4[%c0_6, %c0_7] : memref<128x128xf32, #tpu.memory_space<vmem>>, vector<128x128xf32>
    %cst_8 = arith.constant dense<0.000000e+00> : vector<8x128xf32>
    %9 = tpu.matmul %7, %8, %cst_8 {dimension_numbers = #tpu.dot_dimension_numbers<[1], [0], [0], [1], [0, 0, 1, 1], [], []>, precision = #tpu.contract_precision<fp32>} : vector<8x128xf32>, vector<128x128xf32>, vector<8x128xf32> -> vector<8x128xf32>
    %c0_9 = arith.constant 0 : index
    %c0_10 = arith.constant 0 : index
    %10 = vector.load %arg5[%c0_9, %c0_10] : memref<1x128xf32, #tpu.memory_space<vmem>>, vector<1x128xf32>
    %11 = vector.broadcast %10 : vector<1x128xf32> to vector<8x128xf32>
    %12 = arith.addf %9, %11 : vector<8x128xf32>
    %13 = arith.addf %12, %0 : vector<8x128xf32>
    %c0_11 = arith.constant 0 : index
    %c0_12 = arith.constant 0 : index
    %14 = vector.load %arg6[%c0_11, %c0_12] : memref<1x128xf32, #tpu.memory_space<vmem>>, vector<1x128xf32>
    %c0_13 = arith.constant 0 : index
    %c0_14 = arith.constant 0 : index
    %15 = vector.load %arg7[%c0_13, %c0_14] : memref<1x128xf32, #tpu.memory_space<vmem>>, vector<1x128xf32>
    %cst_15 = arith.constant dense<0.000000e+00> : vector<8xf32>
    %16 = vector.multi_reduction <add>, %13, %cst_15 [1] : vector<8x128xf32> to vector<8xf32>
    %17 = vector.shape_cast %16 : vector<8xf32> to vector<8x1xf32>
    %cst_16 = arith.constant 3.125000e-02 : f32
    %18 = vector.broadcast %cst_16 : f32 to vector<8x1xf32>
    %19 = arith.mulf %17, %18 : vector<8x1xf32>
    %20 = tpu.iota {dimensions = array<i32: 1>} : vector<8x128xi32>
    %c32_i32 = arith.constant 32 : i32
    %21 = vector.broadcast %c32_i32 : i32 to vector<8x128xi32>
    %22 = arith.cmpi slt, %20, %21 : vector<8x128xi32>
    %23 = vector.broadcast %19 : vector<8x1xf32> to vector<8x128xf32>
    %24 = arith.subf %13, %23 : vector<8x128xf32>
    %cst_17 = arith.constant 0.000000e+00 : f32
    %25 = vector.broadcast %cst_17 : f32 to vector<8x128xf32>
    %26 = arith.select %22, %24, %25 : vector<8x128xi1>, vector<8x128xf32>
    %27 = arith.mulf %26, %26 : vector<8x128xf32>
    %cst_18 = arith.constant dense<0.000000e+00> : vector<8xf32>
    %28 = vector.multi_reduction <add>, %27, %cst_18 [1] : vector<8x128xf32> to vector<8xf32>
    %29 = vector.shape_cast %28 : vector<8xf32> to vector<8x1xf32>
    %cst_19 = arith.constant 3.125000e-02 : f32
    %30 = vector.broadcast %cst_19 : f32 to vector<8x1xf32>
    %31 = arith.mulf %29, %30 : vector<8x1xf32>
    %cst_20 = arith.constant 9.99999997E-7 : f32
    %32 = vector.broadcast %cst_20 : f32 to vector<8x1xf32>
    %33 = arith.addf %31, %32 : vector<8x1xf32>
    %34 = math.rsqrt %33 : vector<8x1xf32>
    %35 = vector.broadcast %34 : vector<8x1xf32> to vector<8x128xf32>
    %36 = arith.mulf %26, %35 : vector<8x128xf32>
    %37 = vector.broadcast %14 : vector<1x128xf32> to vector<8x128xf32>
    %38 = arith.mulf %36, %37 : vector<8x128xf32>
    %39 = vector.broadcast %15 : vector<1x128xf32> to vector<8x128xf32>
    %40 = arith.addf %38, %39 : vector<8x128xf32>
    %c0_21 = arith.constant 0 : index
    %c0_22 = arith.constant 0 : index
    %41 = vector.load %arg8[%c0_21, %c0_22] : memref<8x128xf32, #tpu.memory_space<vmem>>, vector<8x128xf32>
    tpu.vector_store %arg8[%c0_21, %c0_22], %40 {strides = array<i32>} : memref<8x128xf32, #tpu.memory_space<vmem>>, vector<8x128xf32>,
    return
  }
  func.func @transform_0(%arg0: i32) -> (i32, i32) {
    %c0_i32 = arith.constant 0 : i32
    %c0_i32_0 = arith.constant 0 : i32
    return %arg0, %c0_i32 : i32, i32
  }
  func.func @transform_1(%arg0: i32) -> (i32, i32) {
    %c0_i32 = arith.constant 0 : i32
    %c0_i32_0 = arith.constant 0 : i32
    %c0_i32_1 = arith.constant 0 : i32
    return %c0_i32, %c0_i32_0 : i32, i32
  }
  func.func @transform_2(%arg0: i32) -> (i32, i32) {
    %c0_i32 = arith.constant 0 : i32
    %c0_i32_0 = arith.constant 0 : i32
    %c0_i32_1 = arith.constant 0 : i32
    return %c0_i32, %c0_i32_0 : i32, i32
  }
  func.func @transform_3(%arg0: i32) -> (i32, i32) {
    %c0_i32 = arith.constant 0 : i32
    %c0_i32_0 = arith.constant 0 : i32
    %c0_i32_1 = arith.constant 0 : i32
    return %c0_i32, %c0_i32_0 : i32, i32
  }
  func.func @transform_4(%arg0: i32) -> (i32, i32) {
    %c0_i32 = arith.constant 0 : i32
    %c0_i32_0 = arith.constant 0 : i32
    %c0_i32_1 = arith.constant 0 : i32
    return %c0_i32, %c0_i32_0 : i32, i32
  }
  func.func @transform_5(%arg0: i32) -> (i32, i32) {
    %c0_i32 = arith.constant 0 : i32
    %c0_i32_0 = arith.constant 0 : i32
    %c0_i32_1 = arith.constant 0 : i32
    return %c0_i32, %c0_i32_0 : i32, i32
  }
  func.func @transform_6(%arg0: i32) -> (i32, i32) {
    %c0_i32 = arith.constant 0 : i32
    %c0_i32_0 = arith.constant 0 : i32
    %c0_i32_1 = arith.constant 0 : i32
    return %c0_i32, %c0_i32_0 : i32, i32
  }
  func.func @transform_7(%arg0: i32) -> (i32, i32) {
    %c0_i32 = arith.constant 0 : i32
    %c0_i32_0 = arith.constant 0 : i32
    return %arg0, %c0_i32 : i32, i32
  }
}

</mosaic_0001>

<llo_original>
// kernel: tpu_custom_call.1
$region0: #{tpu_custom_call.1}
  #allocation0 [shape = 'u32[]', space=smem, size = 0x4, offset = 0x4, fixed_abs, tag = 'smem constant byte address 0x4 - core index']
  #allocation1 [shape = 'u32[72,128]{1,0:T(1,128)}', space=vmem, size = 0x9000, scoped, tag = 'internal scratch']
  %s0 = inlined_call_operand.hbm [shape: f32[16,128], index: 0, kind: input, shape index: {}]
  %s1 = inlined_call_operand.hbm [shape: f32[128,128], index: 1, kind: input, shape index: {}]
  %s2 = inlined_call_operand.vmem [shape: f32[1,128], index: 2, kind: input, shape index: {}]
  %s3 = inlined_call_operand.hbm [shape: f32[128,128], index: 3, kind: input, shape index: {}]
  %s4 = inlined_call_operand.vmem [shape: f32[1,128], index: 4, kind: input, shape index: {}]
  %s5 = inlined_call_operand.vmem [shape: f32[1,128], index: 5, kind: input, shape index: {}]
  %s6 = inlined_call_operand.vmem [shape: f32[1,128], index: 6, kind: input, shape index: {}]
  %s7 = inlined_call_operand.hbm [shape: f32[16,128], index: 7, kind: output, shape index: {}]
  %s8 = sld [smem:[#allocation0]]
  $region73: #{tpu_custom_call.1} parent=0
    _
  %s10 = ssub.s32 1, %s8
  %s11 = scalar_select 0, %s10, %s8
  $region1: #{tpu_custom_call.1} parent=0
    #allocation2 [shape = 'u8[8192]{0}', space=vmem, size = 0x2000, scoped, tag = 'input window, operand 0']
    #allocation3 [shape = 's32[2]{0}', space=sflag, size = 0x8, scoped, tag = 'scoped memory for tpu_custom_call.1']
    #allocation4 [shape = 's32[2]{0}', space=sflag, size = 0x8, scoped, tag = 'scoped memory for tpu_custom_call.1']
    #allocation5 [shape = 'u8[65536]{0}', space=vmem, size = 0x10000, scoped, tag = 'input window, operand 1, single buffered']
    #allocation6 [shape = 's32[1]{0}', space=sflag, size = 0x4, scoped, tag = 'scoped memory for tpu_custom_call.1']
    #allocation7 [shape = 'u8[65536]{0}', space=vmem, size = 0x10000, scoped, tag = 'input window, operand 3, single buffered']
    #allocation8 [shape = 'u8[8192]{0}', space=vmem, size = 0x2000, scoped, tag = 'output window, operand 0']
    %12 = vsyncpa [#allocation3], 0
    %s13 = scalar_lea.sflag [#allocation3], 1
    %14 = vsyncpa %s13, 0
    %15 = vsyncpa [#allocation6], 0
    %16 = vsyncpa [#allocation4], 0
    %s17 = scalar_lea.sflag [#allocation4], 1
    %18 = vsyncpa %s17, 0
    loop: start=0, step=1, limit=4
    $region2: #{tpu_custom_call.1} parent=1 // loop_pre_header
      _
    $region3: #{tpu_custom_call.1} parent=1 // loop_header
      %s20 = sphi 0, %s24
      %p21 = scmp.ge.s32.totalorder %s20, 4
      %s30 = sphi 0, %s32
      %s33 = sphi 0, %s30
      %s34 = sphi 0, %s33
      %s50 = sphi 0, %s34
      %s54 = sphi 0, %s54
      %s56 = sphi 0, %s54
      %s57 = sphi 0, %s56
      %s71 = sphi 0, %s57
      %s75 = sphi 0, %s75
      %s77 = sphi 0, %s75
      %s78 = sphi 0, %s77
      %s92 = sphi 0, %s78
      %s96 = sphi 0, %s96
      %s98 = sphi 0, %s96
      %s99 = sphi 0, %s98
      %s113 = sphi 0, %s99
      %s117 = sphi 0, %s117
      %s119 = sphi 0, %s117
      %s120 = sphi 0, %s119
      %s134 = sphi 0, %s120
      %s138 = sphi 0, %s138
      %s140 = sphi 0, %s138
      %s141 = sphi 0, %s140
      %s155 = sphi 0, %s141
      %s159 = sphi 0, %s159
      %s161 = sphi 0, %s159
      %s162 = sphi 0, %s161
      %s176 = sphi 0, %s162
      %s182 = sphi 0, %s184
      %s185 = sphi 0, %s182
      %s186 = sphi 0, %s185
      %s202 = sphi 0, %s186
    $region4: #{tpu_custom_call.1} parent=1 // loop_header_branch
      %23 = sbr.rel (%p21) target = $region8
    $region5: #{tpu_custom_call.1} parent=1 // loop_body
      %s25 = ssub.s32 %s20, 1
      %s26 = ssub.s32 %s20, 2
      %s27 = sadd.s32 %s20, 1
      %s28 = ssub.s32 %s20, %s27
      %p29 = scmp.eq.s32.totalorder %s28, 0
      %s31 = sadd.s32 %s30, 1
      %s32 = scalar_select %p29, %s30, %s31
      %p35 = pneg %p29
      %p36 = scmp.eq.s32.totalorder %s20, 1
      %p37 = por %p35, %p36
      %p38 = scmp.ne.s32.totalorder %s30, %s33
      %p39 = scmp.eq.s32.totalorder %s20, 0
      %p40 = por %p38, %p39
      %p41 = scmp.ne.s32.totalorder %s30, %s33
      %p42 = scmp.eq.s32.totalorder %s25, 1
      %p43 = por %p41, %p42
      %p44 = scmp.ne.s32.totalorder %s33, %s34
      %p45 = scmp.eq.s32.totalorder %s25, 0
      %p46 = por %p44, %p45
      %p47 = scmp.ne.s32.totalorder %s33, %s34
      %p48 = scmp.eq.s32.totalorder %s26, 1
      %p49 = por %p47, %p48
      %p51 = scmp.ne.s32.totalorder %s34, %s50
      %p52 = scmp.eq.s32.totalorder %s26, 0
      %p53 = por %p51, %p52
      %s55 = sadd.s32 %s54, 1
      %p58 = scmp.eq.s32.totalorder %s20, 1
      %p59 = scmp.ne.s32.totalorder %s54, %s56
      %p60 = scmp.eq.s32.totalorder %s20, 0
      %p61 = por %p59, %p60
      %p62 = scmp.ne.s32.totalorder %s54, %s56
      %p63 = scmp.eq.s32.totalorder %s25, 1
      %p64 = por %p62, %p63
      %p65 = scmp.ne.s32.totalorder %s56, %s57
      %p66 = scmp.eq.s32.totalorder %s25, 0
      %p67 = por %p65, %p66
      %p68 = scmp.ne.s32.totalorder %s56, %s57
      %p69 = scmp.eq.s32.totalorder %s26, 1
      %p70 = por %p68, %p69
      %p72 = scmp.ne.s32.totalorder %s57, %s71
      %p73 = scmp.eq.s32.totalorder %s26, 0
      %p74 = por %p72, %p73
      %s76 = sadd.s32 %s75, 1
      %p79 = scmp.eq.s32.totalorder %s20, 1
      %p80 = scmp.ne.s32.totalorder %s75, %s77
      %p81 = scmp.eq.s32.totalorder %s20, 0
      %p82 = por %p80, %p81
      %p83 = scmp.ne.s32.totalorder %s75, %s77
      %p84 = scmp.eq.s32.totalorder %s25, 1
      %p85 = por %p83, %p84
      %p86 = scmp.ne.s32.totalorder %s77, %s78
      %p87 = scmp.eq.s32.totalorder %s25, 0
      %p88 = por %p86, %p87
      %p89 = scmp.ne.s32.totalorder %s77, %s78
      %p90 = scmp.eq.s32.totalorder %s26, 1
      %p91 = por %p89, %p90
      %p93 = scmp.ne.s32.totalorder %s78, %s92
      %p94 = scmp.eq.s32.totalorder %s26, 0
      %p95 = por %p93, %p94
      %s97 = sadd.s32 %s96, 1
      %p100 = scmp.eq.s32.totalorder %s20, 1
      %p101 = scmp.ne.s32.totalorder %s96, %s98
      %p102 = scmp.eq.s32.totalorder %s20, 0
      %p103 = por %p101, %p102
      %p104 = scmp.ne.s32.totalorder %s96, %s98
      %p105 = scmp.eq.s32.totalorder %s25, 1
      %p106 = por %p104, %p105
      %p107 = scmp.ne.s32.totalorder %s98, %s99
      %p108 = scmp.eq.s32.totalorder %s25, 0
      %p109 = por %p107, %p108
      %p110 = scmp.ne.s32.totalorder %s98, %s99
      %p111 = scmp.eq.s32.totalorder %s26, 1
      %p112 = por %p110, %p111
      %p114 = scmp.ne.s32.totalorder %s99, %s113
      %p115 = scmp.eq.s32.totalorder %s26, 0
      %p116 = por %p114, %p115
      %s118 = sadd.s32 %s117, 1
      %p121 = scmp.eq.s32.totalorder %s20, 1
      %p122 = scmp.ne.s32.totalorder %s117, %s119
      %p123 = scmp.eq.s32.totalorder %s20, 0
      %p124 = por %p122, %p123
      %p125 = scmp.ne.s32.totalorder %s117, %s119
      %p126 = scmp.eq.s32.totalorder %s25, 1
      %p127 = por %p125, %p126
      %p128 = scmp.ne.s32.totalorder %s119, %s120
      %p129 = scmp.eq.s32.totalorder %s25, 0
      %p130 = por %p128, %p129
      %p131 = scmp.ne.s32.totalorder %s119, %s120
      %p132 = scmp.eq.s32.totalorder %s26, 1
      %p133 = por %p131, %p132
      %p135 = scmp.ne.s32.totalorder %s120, %s134
      %p136 = scmp.eq.s32.totalorder %s26, 0
      %p137 = por %p135, %p136
      %s139 = sadd.s32 %s138, 1
      %p142 = scmp.eq.s32.totalorder %s20, 1
      %p143 = scmp.ne.s32.totalorder %s138, %s140
      %p144 = scmp.eq.s32.totalorder %s20, 0
      %p145 = por %p143, %p144
      %p146 = scmp.ne.s32.totalorder %s138, %s140
      %p147 = scmp.eq.s32.totalorder %s25, 1
      %p148 = por %p146, %p147
      %p149 = scmp.ne.s32.totalorder %s140, %s141
      %p150 = scmp.eq.s32.totalorder %s25, 0
      %p151 = por %p149, %p150
      %p152 = scmp.ne.s32.totalorder %s140, %s141
      %p153 = scmp.eq.s32.totalorder %s26, 1
      %p154 = por %p152, %p153
      %p156 = scmp.ne.s32.totalorder %s141, %s155
      %p157 = scmp.eq.s32.totalorder %s26, 0
      %p158 = por %p156, %p157
      %s160 = sadd.s32 %s159, 1
      %p163 = scmp.eq.s32.totalorder %s20, 1
      %p164 = scmp.ne.s32.totalorder %s159, %s161
      %p165 = scmp.eq.s32.totalorder %s20, 0
      %p166 = por %p164, %p165
      %p167 = scmp.ne.s32.totalorder %s159, %s161
      %p168 = scmp.eq.s32.totalorder %s25, 1
      %p169 = por %p167, %p168
      %p170 = scmp.ne.s32.totalorder %s161, %s162
      %p171 = scmp.eq.s32.totalorder %s25, 0
      %p172 = por %p170, %p171
      %p173 = scmp.ne.s32.totalorder %s161, %s162
      %p174 = scmp.eq.s32.totalorder %s26, 1
      %p175 = por %p173, %p174
      %p177 = scmp.ne.s32.totalorder %s162, %s176
      %p178 = scmp.eq.s32.totalorder %s26, 0
      %p179 = por %p177, %p178
      %s180 = ssub.s32 %s20, %s27
      %p181 = scmp.eq.s32.totalorder %s180, 0
      %s183 = sadd.s32 %s182, 1
      %s184 = scalar_select %p181, %s182, %s183
      %p187 = pneg %p181
      %p188 = scmp.eq.s32.totalorder %s20, 1
      %p189 = por %p187, %p188
      %p190 = scmp.ne.s32.totalorder %s182, %s185
      %p191 = scmp.eq.s32.totalorder %s20, 0
      %p192 = por %p190, %p191
      %p193 = scmp.ne.s32.totalorder %s182, %s185
      %p194 = scmp.eq.s32.totalorder %s25, 1
      %p195 = por %p193, %p194
      %p196 = scmp.ne.s32.totalorder %s185, %s186
      %p197 = scmp.eq.s32.totalorder %s25, 0
      %p198 = por %p196, %p197
      %p199 = scmp.ne.s32.totalorder %s185, %s186
      %p200 = scmp.eq.s32.totalorder %s26, 1
      %p201 = por %p199, %p200
      %p203 = scmp.ne.s32.totalorder %s186, %s202
      %p204 = scmp.eq.s32.totalorder %s26, 0
      %p205 = por %p203, %p204
      %p206 = scmp.le.s32.totalorder 1, %s20
      %p207 = scmp.lt.s32.totalorder %s20, 3
      %p208 = pnand %p206, %p207
      %p209 = pneg %p208
      // Predicated region
      $region9: #{tpu_custom_call.1} parent=5 // pred_check
        _
      $region10: #{tpu_custom_call.1} parent=5 // pred_check_branch
        %211 = sbr.rel (%p208) target = $region12
      $region11: #{tpu_custom_call.1} parent=5 // pred_region
        %s212 = ssub.s32 %s20, 1
        // Predicated region
        $region13: #{tpu_custom_call.1} parent=11 // pred_check
          %p213 = pneg %p67
        $region14: #{tpu_custom_call.1} parent=11 // pred_check_branch
          %215 = sbr.rel (%p213) target = $region16
        $region15: #{tpu_custom_call.1} parent=11 // pred_region
          %217 = vsyncadd [#allocation6], 0
          %s218 = sshll.u32 %s1, 4
          %s219 = int_to_ptr.hbm [resolvable:$true] %s218
          %s220 = sshll.u32 [#allocation5], 4
          %s221 = int_to_ptr.vmem [resolvable:$true] %s220
          %226 = dma.hbm_to_vmem [thread:$0]  %s219, 2048, %s221, [#allocation6], 128, 128, 8
        $region16: #{tpu_custom_call.1} parent=11 // pred_fallthru
          _
        // Predicated region
        $region17: #{tpu_custom_call.1} parent=11 // pred_check
          %p227 = pneg %p88
        $region18: #{tpu_custom_call.1} parent=11 // pred_check_branch
          %229 = sbr.rel (%p227) target = $region20
        $region19: #{tpu_custom_call.1} parent=11 // pred_region
          _
        $region20: #{tpu_custom_call.1} parent=11 // pred_fallthru
          _
        // Predicated region
        $region21: #{tpu_custom_call.1} parent=11 // pred_check
          %p230 = pneg %p109
        $region22: #{tpu_custom_call.1} parent=11 // pred_check_branch
          %232 = sbr.rel (%p230) target = $region24
        $region23: #{tpu_custom_call.1} parent=11 // pred_region
          %234 = vsyncadd [#allocation6], 0
          %s235 = sshll.u32 %s3, 4
          %s236 = int_to_ptr.hbm [resolvable:$true] %s235
          %s237 = sshll.u32 [#allocation7], 4
          %s238 = int_to_ptr.vmem [resolvable:$true] %s237
          %243 = dma.hbm_to_vmem [thread:$0]  %s236, 2048, %s238, [#allocation6], 128, 128, 8
        $region24: #{tpu_custom_call.1} parent=11 // pred_fallthru
          _
        // Predicated region
        $region25: #{tpu_custom_call.1} parent=11 // pred_check
          %p244 = pneg %p130
        $region26: #{tpu_custom_call.1} parent=11 // pred_check_branch
          %246 = sbr.rel (%p244) target = $region28
        $region27: #{tpu_custom_call.1} parent=11 // pred_region
          _
        $region28: #{tpu_custom_call.1} parent=11 // pred_fallthru
          _
        // Predicated region
        $region29: #{tpu_custom_call.1} parent=11 // pred_check
          %p247 = pneg %p151
        $region30: #{tpu_custom_call.1} parent=11 // pred_check_branch
          %249 = sbr.rel (%p247) target = $region32
        $region31: #{tpu_custom_call.1} parent=11 // pred_region
          _
        $region32: #{tpu_custom_call.1} parent=11 // pred_fallthru
          _
        // Predicated region
        $region33: #{tpu_custom_call.1} parent=11 // pred_check
          %p250 = pneg %p172
        $region34: #{tpu_custom_call.1} parent=11 // pred_check_branch
          %252 = sbr.rel (%p250) target = $region36
        $region35: #{tpu_custom_call.1} parent=11 // pred_region
          _
        $region36: #{tpu_custom_call.1} parent=11 // pred_fallthru
          _
      $region12: #{tpu_custom_call.1} parent=5 // pred_fallthru
        _
      %p253 = scmp.lt.s32.totalorder %s20, 2
      // Predicated region
      $region37: #{tpu_custom_call.1} parent=5 // pred_check
        %p254 = pneg %p253
      $region38: #{tpu_custom_call.1} parent=5 // pred_check_branch
        %256 = sbr.rel (%p254) target = $region40
      $region39: #{tpu_custom_call.1} parent=5 // pred_region
        // Predicated region
        $region41: #{tpu_custom_call.1} parent=39 // pred_check
          %p257 = pneg %p40
        $region42: #{tpu_custom_call.1} parent=39 // pred_check_branch
          %259 = sbr.rel (%p257) target = $region44
        $region43: #{tpu_custom_call.1} parent=39 // pred_region
          %s260 = sand.u32 %s30, 1
          %s261 = scalar_lea.sflag [#allocation3], %s260
          %s262 = sand.u32 %s30, 1
          %s263 = smul.addr %s262, 8
          %s264 = scalar_lea.vmem [#allocation2], %s263
          %266 = vsyncadd %s261, 0
          %s267 = smul.addr %s20, 8
          %s268 = scalar_lea.hbm %s0, %s267
          %s270 = sshll.u32 %s268, 4
          %s271 = int_to_ptr.hbm [resolvable:$true] %s270
          %s272 = sshll.u32 %s264, 4
          %s273 = int_to_ptr.vmem [resolvable:$true] %s272
          %275 = dma.hbm_to_vmem [thread:$0]  %s271, 128, %s273, %s261
        $region44: #{tpu_custom_call.1} parent=39 // pred_fallthru
          _
      $region40: #{tpu_custom_call.1} parent=5 // pred_fallthru
        _
      %p276 = scmp.le.s32.totalorder 1, %s20
      %p277 = scmp.lt.s32.totalorder %s20, 3
      %p278 = pnand %p276, %p277
      %p279 = pneg %p278
      // Predicated region
      $region45: #{tpu_custom_call.1} parent=5 // pred_check
        _
      $region46: #{tpu_custom_call.1} parent=5 // pred_check_branch
        %281 = sbr.rel (%p278) target = $region48
      $region47: #{tpu_custom_call.1} parent=5 // pred_region
        %s282 = ssub.s32 %s20, 1
        %s283 = sand.u32 %s33, 1
        %s284 = scalar_lea.sflag [#allocation3], %s283
        %s285 = sand.u32 %s33, 1
        %s286 = smul.addr %s285, 8
        %s287 = scalar_lea.vmem [#allocation2], %s286
        // Predicated region
        $region49: #{tpu_custom_call.1} parent=47 // pred_check
          %p288 = pneg %p46
        $region50: #{tpu_custom_call.1} parent=47 // pred_check_branch
          %290 = sbr.rel (%p288) target = $region52
        $region51: #{tpu_custom_call.1} parent=47 // pred_region
          %292 = dma.done %s284, 128
        $region52: #{tpu_custom_call.1} parent=47 // pred_fallthru
          _
        // Predicated region
        $region53: #{tpu_custom_call.1} parent=47 // pred_check
          %p293 = pneg %p67
        $region54: #{tpu_custom_call.1} parent=47 // pred_check_branch
          %295 = sbr.rel (%p293) target = $region56
        $region55: #{tpu_custom_call.1} parent=47 // pred_region
          %297 = dma.done [#allocation6], 2048
        $region56: #{tpu_custom_call.1} parent=47 // pred_fallthru
          _
        // Predicated region
        $region57: #{tpu_custom_call.1} parent=47 // pred_check
          %p298 = pneg %p109
        $region58: #{tpu_custom_call.1} parent=47 // pred_check_branch
          %300 = sbr.rel (%p298) target = $region60
        $region59: #{tpu_custom_call.1} parent=47 // pred_region
          %302 = dma.done [#allocation6], 2048
        $region60: #{tpu_custom_call.1} parent=47 // pred_fallthru
          _
        %s303 = sand.u32 %s33, 1
        %s304 = scalar_lea.sflag [#allocation3], %s303
        %s305 = sand.u32 %s33, 1
        %s306 = smul.addr %s305, 8
        %s307 = scalar_lea.vmem [#allocation2], %s306
        %p308 = pneg %p46
        %p309 = pneg %p43
        %p310 = pneg %p67
        %p311 = pneg %p64
        %p312 = pneg %p88
        %p313 = pneg %p85
        %p314 = pneg %p109
        %p315 = pneg %p106
        %p316 = pneg %p130
        %p317 = pneg %p127
        %p318 = pneg %p151
        %p319 = pneg %p148
        %p320 = pneg %p172
        %p321 = pneg %p169
        %p322 = pneg %p198
        %p323 = pneg %p195
        %s324 = sand.u32 %s185, 1
        %s325 = scalar_lea.sflag [#allocation4], %s324
        %s326 = sand.u32 %s185, 1
        %s327 = smul.addr %s326, 8
        %s328 = scalar_lea.vmem [#allocation8], %s327
        %v329 = vld [vmem:[%s287] sm:$0xff]
        %v330 = vld [vmem:[#allocation5] sm:$0xff]
        %v331 = vld [vmem:[#allocation5 + $0x8] sm:$0xff]
        %v332 = vld [vmem:[#allocation5 + $0x10] sm:$0xff]
        %v333 = vld [vmem:[#allocation5 + $0x18] sm:$0xff]
        %v334 = vld [vmem:[#allocation5 + $0x20] sm:$0xff]
        %v335 = vld [vmem:[#allocation5 + $0x28] sm:$0xff]
        %v336 = vld [vmem:[#allocation5 + $0x30] sm:$0xff]
        %v337 = vld [vmem:[#allocation5 + $0x38] sm:$0xff]
        %v338 = vld [vmem:[#allocation5 + $0x40] sm:$0xff]
        %v339 = vld [vmem:[#allocation5 + $0x48] sm:$0xff]
        %v340 = vld [vmem:[#allocation5 + $0x50] sm:$0xff]
        %v341 = vld [vmem:[#allocation5 + $0x58] sm:$0xff]
        %v342 = vld [vmem:[#allocation5 + $0x60] sm:$0xff]
        %v343 = vld [vmem:[#allocation5 + $0x68] sm:$0xff]
        %v344 = vld [vmem:[#allocation5 + $0x70] sm:$0xff]
        %v345 = vld [vmem:[#allocation5 + $0x78] sm:$0xff]
        %v346 = vld [vmem:[%s2] sm:$0x1]
        %v348 = vperm.slane %v346, 0
        %v350 = vand.u32 %v345, 4294901760
        %351 = vmatpush.msra.mxu0 %v350
        %v352 = vand.u32 %v344, 4294901760
        %353 = vmatpush.msra.mxu0 %v352
        %v354 = vand.u32 %v343, 4294901760
        %355 = vmatpush.msra.mxu0 %v354
        %v356 = vand.u32 %v342, 4294901760
        %357 = vmatpush.msra.mxu0 %v356
        %v358 = vand.u32 %v341, 4294901760
        %359 = vmatpush.msra.mxu0 %v358
        %v360 = vand.u32 %v340, 4294901760
        %361 = vmatpush.msra.mxu0 %v360
        %v362 = vand.u32 %v339, 4294901760
        %363 = vmatpush.msra.mxu0 %v362
        %v364 = vand.u32 %v338, 4294901760
        %365 = vmatpush.msra.mxu0 %v364
        %v366 = vand.u32 %v337, 4294901760
        %367 = vmatpush.msra.mxu0 %v366
        %v368 = vand.u32 %v336, 4294901760
        %369 = vmatpush.msra.mxu0 %v368
        %v370 = vand.u32 %v335, 4294901760
        %371 = vmatpush.msra.mxu0 %v370
        %v372 = vand.u32 %v334, 4294901760
        %373 = vmatpush.msra.mxu0 %v372
        %v374 = vand.u32 %v333, 4294901760
        %375 = vmatpush.msra.mxu0 %v374
        %v376 = vand.u32 %v332, 4294901760
        %377 = vmatpush.msra.mxu0 %v376
        %v378 = vand.u32 %v331, 4294901760
        %379 = vmatpush.msra.mxu0 %v378
        %v380 = vand.u32 %v330, 4294901760
        %381 = vmatpush.msra.mxu0 %v380
        %v382 = vand.u32 %v329, 4294901760
        %v383 = vsub.f32 %v329, %v382
        %v384 = vand.u32 %v383, 4294901760
        %v385 = vsub.f32 %v383, %v384
        %v386 = vand.u32 %v385, 4294901760
        %387 = vmatmul.f32.gmra.mxu0 %v386
        %v388 = vpop.f32.mrf.mxu0
        %v389 = vadd.f32 %v348, %v388
        %390 = vdwg.mxu0
        %v391 = vand.u32 %v345, 4294901760
        %v392 = vsub.f32 %v345, %v391
        %v393 = vand.u32 %v392, 4294901760
        %v394 = vsub.f32 %v392, %v393
        %v395 = vand.u32 %v394, 4294901760
        %396 = vmatpush.msra.mxu0 %v395
        %v397 = vand.u32 %v344, 4294901760
        %v398 = vsub.f32 %v344, %v397
        %v399 = vand.u32 %v398, 4294901760
        %v400 = vsub.f32 %v398, %v399
        %v401 = vand.u32 %v400, 4294901760
        %402 = vmatpush.msra.mxu0 %v401
        %v403 = vand.u32 %v343, 4294901760
        %v404 = vsub.f32 %v343, %v403
        %v405 = vand.u32 %v404, 4294901760
        %v406 = vsub.f32 %v404, %v405
        %v407 = vand.u32 %v406, 4294901760
        %408 = vmatpush.msra.mxu0 %v407
        %v409 = vand.u32 %v342, 4294901760
        %v410 = vsub.f32 %v342, %v409
        %v411 = vand.u32 %v410, 4294901760
        %v412 = vsub.f32 %v410, %v411
        %v413 = vand.u32 %v412, 4294901760
        %414 = vmatpush.msra.mxu0 %v413
        %v415 = vand.u32 %v341, 4294901760
        %v416 = vsub.f32 %v341, %v415
        %v417 = vand.u32 %v416, 4294901760
        %v418 = vsub.f32 %v416, %v417
        %v419 = vand.u32 %v418, 4294901760
        %420 = vmatpush.msra.mxu0 %v419
        %v421 = vand.u32 %v340, 4294901760
        %v422 = vsub.f32 %v340, %v421
        %v423 = vand.u32 %v422, 4294901760
        %v424 = vsub.f32 %v422, %v423
        %v425 = vand.u32 %v424, 4294901760
        %426 = vmatpush.msra.mxu0 %v425
        %v427 = vand.u32 %v339, 4294901760
        %v428 = vsub.f32 %v339, %v427
        %v429 = vand.u32 %v428, 4294901760
        %v430 = vsub.f32 %v428, %v429
        %v431 = vand.u32 %v430, 4294901760
        %432 = vmatpush.msra.mxu0 %v431
        %v433 = vand.u32 %v338, 4294901760
        %v434 = vsub.f32 %v338, %v433
        %v435 = vand.u32 %v434, 4294901760
        %v436 = vsub.f32 %v434, %v435
        %v437 = vand.u32 %v436, 4294901760
        %438 = vmatpush.msra.mxu0 %v437
        %v439 = vand.u32 %v337, 4294901760
        %v440 = vsub.f32 %v337, %v439
        %v441 = vand.u32 %v440, 4294901760
        %v442 = vsub.f32 %v440, %v441
        %v443 = vand.u32 %v442, 4294901760
        %444 = vmatpush.msra.mxu0 %v443
        %v445 = vand.u32 %v336, 4294901760
        %v446 = vsub.f32 %v336, %v445
        %v447 = vand.u32 %v446, 4294901760
        %v448 = vsub.f32 %v446, %v447
        %v449 = vand.u32 %v448, 4294901760
        %450 = vmatpush.msra.mxu0 %v449
        %v451 = vand.u32 %v335, 4294901760
        %v452 = vsub.f32 %v335, %v451
        %v453 = vand.u32 %v452, 4294901760
        %v454 = vsub.f32 %v452, %v453
        %v455 = vand.u32 %v454, 4294901760
        %456 = vmatpush.msra.mxu0 %v455
        %v457 = vand.u32 %v334, 4294901760
        %v458 = vsub.f32 %v334, %v457
        %v459 = vand.u32 %v458, 4294901760
        %v460 = vsub.f32 %v458, %v459
        %v461 = vand.u32 %v460, 4294901760
        %462 = vmatpush.msra.mxu0 %v461
        %v463 = vand.u32 %v333, 4294901760
        %v464 = vsub.f32 %v333, %v463
        %v465 = vand.u32 %v464, 4294901760
        %v466 = vsub.f32 %v464, %v465
        %v467 = vand.u32 %v466, 4294901760
        %468 = vmatpush.msra.mxu0 %v467
        %v469 = vand.u32 %v332, 4294901760
        %v470 = vsub.f32 %v332, %v469
        %v471 = vand.u32 %v470, 4294901760
        %v472 = vsub.f32 %v470, %v471
        %v473 = vand.u32 %v472, 4294901760
        %474 = vmatpush.msra.mxu0 %v473
        %v475 = vand.u32 %v331, 4294901760
        %v476 = vsub.f32 %v331, %v475
        %v477 = vand.u32 %v476, 4294901760
        %v478 = vsub.f32 %v476, %v477
        %v479 = vand.u32 %v478, 4294901760
        %480 = vmatpush.msra.mxu0 %v479
        %v481 = vand.u32 %v330, 4294901760
        %v482 = vsub.f32 %v330, %v481
        %v483 = vand.u32 %v482, 4294901760
        %v484 = vsub.f32 %v482, %v483
        %v485 = vand.u32 %v484, 4294901760
        %486 = vmatpush.msra.mxu0 %v485
        %v487 = vand.u32 %v329, 4294901760
        %488 = vmatmul.f32.gmra.mxu0 %v487
        %v489 = vpop.f32.mrf.mxu0
        %v490 = vadd.f32 %v389, %v489
        %491 = vdwg.mxu0
        %v492 = vand.u32 %v345, 4294901760
        %v493 = vsub.f32 %v345, %v492
        %494 = vmatpush.msra.mxu0 %v493
        %v495 = vand.u32 %v344, 4294901760
        %v496 = vsub.f32 %v344, %v495
        %497 = vmatpush.msra.mxu0 %v496
        %v498 = vand.u32 %v343, 4294901760
        %v499 = vsub.f32 %v343, %v498
        %500 = vmatpush.msra.mxu0 %v499
        %v501 = vand.u32 %v342, 4294901760
        %v502 = vsub.f32 %v342, %v501
        %503 = vmatpush.msra.mxu0 %v502
        %v504 = vand.u32 %v341, 4294901760
        %v505 = vsub.f32 %v341, %v504
        %506 = vmatpush.msra.mxu0 %v505
        %v507 = vand.u32 %v340, 4294901760
        %v508 = vsub.f32 %v340, %v507
        %509 = vmatpush.msra.mxu0 %v508
        %v510 = vand.u32 %v339, 4294901760
        %v511 = vsub.f32 %v339, %v510
        %512 = vmatpush.msra.mxu0 %v511
        %v513 = vand.u32 %v338, 4294901760
        %v514 = vsub.f32 %v338, %v513
        %515 = vmatpush.msra.mxu0 %v514
        %v516 = vand.u32 %v337, 4294901760
        %v517 = vsub.f32 %v337, %v516
        %518 = vmatpush.msra.mxu0 %v517
        %v519 = vand.u32 %v336, 4294901760
        %v520 = vsub.f32 %v336, %v519
        %521 = vmatpush.msra.mxu0 %v520
        %v522 = vand.u32 %v335, 4294901760
        %v523 = vsub.f32 %v335, %v522
        %524 = vmatpush.msra.mxu0 %v523
        %v525 = vand.u32 %v334, 4294901760
        %v526 = vsub.f32 %v334, %v525
        %527 = vmatpush.msra.mxu0 %v526
        %v528 = vand.u32 %v333, 4294901760
        %v529 = vsub.f32 %v333, %v528
        %530 = vmatpush.msra.mxu0 %v529
        %v531 = vand.u32 %v332, 4294901760
        %v532 = vsub.f32 %v332, %v531
        %533 = vmatpush.msra.mxu0 %v532
        %v534 = vand.u32 %v331, 4294901760
        %v535 = vsub.f32 %v331, %v534
        %536 = vmatpush.msra.mxu0 %v535
        %v537 = vand.u32 %v330, 4294901760
        %v538 = vsub.f32 %v330, %v537
        %539 = vmatpush.msra.mxu0 %v538
        %v540 = vand.u32 %v329, 4294901760
        %v541 = vsub.f32 %v329, %v540
        %542 = vmatmul.f32.gmra.mxu0 %v541
        %v543 = vpop.f32.mrf.mxu0
        %v544 = vadd.f32 %v490, %v543
        %545 = vdwg.mxu0
        %v546 = vand.u32 %v345, 4294901760
        %547 = vmatpush.msra.mxu0 %v546
        %v548 = vand.u32 %v344, 4294901760
        %549 = vmatpush.msra.mxu0 %v548
        %v550 = vand.u32 %v343, 4294901760
        %551 = vmatpush.msra.mxu0 %v550
        %v552 = vand.u32 %v342, 4294901760
        %553 = vmatpush.msra.mxu0 %v552
        %v554 = vand.u32 %v341, 4294901760
        %555 = vmatpush.msra.mxu0 %v554
        %v556 = vand.u32 %v340, 4294901760
        %557 = vmatpush.msra.mxu0 %v556
        %v558 = vand.u32 %v339, 4294901760
        %559 = vmatpush.msra.mxu0 %v558
        %v560 = vand.u32 %v338, 4294901760
        %561 = vmatpush.msra.mxu0 %v560
        %v562 = vand.u32 %v337, 4294901760
        %563 = vmatpush.msra.mxu0 %v562
        %v564 = vand.u32 %v336, 4294901760
        %565 = vmatpush.msra.mxu0 %v564
        %v566 = vand.u32 %v335, 4294901760
        %567 = vmatpush.msra.mxu0 %v566
        %v568 = vand.u32 %v334, 4294901760
        %569 = vmatpush.msra.mxu0 %v568
        %v570 = vand.u32 %v333, 4294901760
        %571 = vmatpush.msra.mxu0 %v570
        %v572 = vand.u32 %v332, 4294901760
        %573 = vmatpush.msra.mxu0 %v572
        %v574 = vand.u32 %v331, 4294901760
        %575 = vmatpush.msra.mxu0 %v574
        %v576 = vand.u32 %v330, 4294901760
        %577 = vmatpush.msra.mxu0 %v576
        %v578 = vand.u32 %v329, 4294901760
        %v579 = vsub.f32 %v329, %v578
        %v580 = vand.u32 %v579, 4294901760
        %581 = vmatmul.f32.gmra.mxu0 %v580
        %v582 = vpop.f32.mrf.mxu0
        %v583 = vadd.f32 %v544, %v582
        %584 = vdwg.mxu0
        %v585 = vand.u32 %v345, 4294901760
        %v586 = vsub.f32 %v345, %v585
        %v587 = vand.u32 %v586, 4294901760
        %588 = vmatpush.msra.mxu0 %v587
        %v589 = vand.u32 %v344, 4294901760
        %v590 = vsub.f32 %v344, %v589
        %v591 = vand.u32 %v590, 4294901760
        %592 = vmatpush.msra.mxu0 %v591
        %v593 = vand.u32 %v343, 4294901760
        %v594 = vsub.f32 %v343, %v593
        %v595 = vand.u32 %v594, 4294901760
        %596 = vmatpush.msra.mxu0 %v595
        %v597 = vand.u32 %v342, 4294901760
        %v598 = vsub.f32 %v342, %v597
        %v599 = vand.u32 %v598, 4294901760
        %600 = vmatpush.msra.mxu0 %v599
        %v601 = vand.u32 %v341, 4294901760
        %v602 = vsub.f32 %v341, %v601
        %v603 = vand.u32 %v602, 4294901760
        %604 = vmatpush.msra.mxu0 %v603
        %v605 = vand.u32 %v340, 4294901760
        %v606 = vsub.f32 %v340, %v605
        %v607 = vand.u32 %v606, 4294901760
        %608 = vmatpush.msra.mxu0 %v607
        %v609 = vand.u32 %v339, 4294901760
        %v610 = vsub.f32 %v339, %v609
        %v611 = vand.u32 %v610, 4294901760
        %612 = vmatpush.msra.mxu0 %v611
        %v613 = vand.u32 %v338, 4294901760
        %v614 = vsub.f32 %v338, %v613
        %v615 = vand.u32 %v614, 4294901760
        %616 = vmatpush.msra.mxu0 %v615
        %v617 = vand.u32 %v337, 4294901760
        %v618 = vsub.f32 %v337, %v617
        %v619 = vand.u32 %v618, 4294901760
        %620 = vmatpush.msra.mxu0 %v619
        %v621 = vand.u32 %v336, 4294901760
        %v622 = vsub.f32 %v336, %v621
        %v623 = vand.u32 %v622, 4294901760
        %624 = vmatpush.msra.mxu0 %v623
        %v625 = vand.u32 %v335, 4294901760
        %v626 = vsub.f32 %v335, %v625
        %v627 = vand.u32 %v626, 4294901760
        %628 = vmatpush.msra.mxu0 %v627
        %v629 = vand.u32 %v334, 4294901760
        %v630 = vsub.f32 %v334, %v629
        %v631 = vand.u32 %v630, 4294901760
        %632 = vmatpush.msra.mxu0 %v631
        %v633 = vand.u32 %v333, 4294901760
        %v634 = vsub.f32 %v333, %v633
        %v635 = vand.u32 %v634, 4294901760
        %636 = vmatpush.msra.mxu0 %v635
        %v637 = vand.u32 %v332, 4294901760
        %v638 = vsub.f32 %v332, %v637
        %v639 = vand.u32 %v638, 4294901760
        %640 = vmatpush.msra.mxu0 %v639
        %v641 = vand.u32 %v331, 4294901760
        %v642 = vsub.f32 %v331, %v641
        %v643 = vand.u32 %v642, 4294901760
        %644 = vmatpush.msra.mxu0 %v643
        %v645 = vand.u32 %v330, 4294901760
        %v646 = vsub.f32 %v330, %v645
        %v647 = vand.u32 %v646, 4294901760
        %648 = vmatpush.msra.mxu0 %v647
        %v649 = vand.u32 %v329, 4294901760
        %650 = vmatmul.f32.gmra.mxu0 %v649
        %v651 = vpop.f32.mrf.mxu0
        %v652 = vadd.f32 %v583, %v651
        %653 = vdwg.mxu0
        %v654 = vand.u32 %v345, 4294901760
        %655 = vmatpush.msra.mxu0 %v654
        %v656 = vand.u32 %v344, 4294901760
        %657 = vmatpush.msra.mxu0 %v656
        %v658 = vand.u32 %v343, 4294901760
        %659 = vmatpush.msra.mxu0 %v658
        %v660 = vand.u32 %v342, 4294901760
        %661 = vmatpush.msra.mxu0 %v660
        %v662 = vand.u32 %v341, 4294901760
        %663 = vmatpush.msra.mxu0 %v662
        %v664 = vand.u32 %v340, 4294901760
        %665 = vmatpush.msra.mxu0 %v664
        %v666 = vand.u32 %v339, 4294901760
        %667 = vmatpush.msra.mxu0 %v666
        %v668 = vand.u32 %v338, 4294901760
        %669 = vmatpush.msra.mxu0 %v668
        %v670 = vand.u32 %v337, 4294901760
        %671 = vmatpush.msra.mxu0 %v670
        %v672 = vand.u32 %v336, 4294901760
        %673 = vmatpush.msra.mxu0 %v672
        %v674 = vand.u32 %v335, 4294901760
        %675 = vmatpush.msra.mxu0 %v674
        %v676 = vand.u32 %v334, 4294901760
        %677 = vmatpush.msra.mxu0 %v676
        %v678 = vand.u32 %v333, 4294901760
        %679 = vmatpush.msra.mxu0 %v678
        %v680 = vand.u32 %v332, 4294901760
        %681 = vmatpush.msra.mxu0 %v680
        %v682 = vand.u32 %v331, 4294901760
        %683 = vmatpush.msra.mxu0 %v682
        %v684 = vand.u32 %v330, 4294901760
        %685 = vmatpush.msra.mxu0 %v684
        %v686 = vand.u32 %v329, 4294901760
        %687 = vmatmul.f32.gmra.mxu0 %v686
        %v688 = vpop.f32.mrf.mxu0
        %v689 = vadd.f32 %v652, %v688
        %690 = vdwg.mxu0
        %v691 = vmax.f32 %v689, 0.0
        %v692 = vld [vmem:[#allocation7] sm:$0xff]
        %v693 = vld [vmem:[#allocation7 + $0x8] sm:$0xff]
        %v694 = vld [vmem:[#allocation7 + $0x10] sm:$0xff]
        %v695 = vld [vmem:[#allocation7 + $0x18] sm:$0xff]
        %v696 = vld [vmem:[#allocation7 + $0x20] sm:$0xff]
        %v697 = vld [vmem:[#allocation7 + $0x28] sm:$0xff]
        %v698 = vld [vmem:[#allocation7 + $0x30] sm:$0xff]
        %v699 = vld [vmem:[#allocation7 + $0x38] sm:$0xff]
        %v700 = vld [vmem:[#allocation7 + $0x40] sm:$0xff]
        %v701 = vld [vmem:[#allocation7 + $0x48] sm:$0xff]
        %v702 = vld [vmem:[#allocation7 + $0x50] sm:$0xff]
        %v703 = vld [vmem:[#allocation7 + $0x58] sm:$0xff]
        %v704 = vld [vmem:[#allocation7 + $0x60] sm:$0xff]
        %v705 = vld [vmem:[#allocation7 + $0x68] sm:$0xff]
        %v706 = vld [vmem:[#allocation7 + $0x70] sm:$0xff]
        %v707 = vld [vmem:[#allocation7 + $0x78] sm:$0xff]
        %v708 = vld [vmem:[%s4] sm:$0x1]
        %v710 = vperm.slane %v708, 0
        %v712 = vand.u32 %v707, 4294901760
        %713 = vmatpush.msra.mxu0 %v712
        %v714 = vand.u32 %v706, 4294901760
        %715 = vmatpush.msra.mxu0 %v714
        %v716 = vand.u32 %v705, 4294901760
        %717 = vmatpush.msra.mxu0 %v716
        %v718 = vand.u32 %v704, 4294901760
        %719 = vmatpush.msra.mxu0 %v718
        %v720 = vand.u32 %v703, 4294901760
        %721 = vmatpush.msra.mxu0 %v720
        %v722 = vand.u32 %v702, 4294901760
        %723 = vmatpush.msra.mxu0 %v722
        %v724 = vand.u32 %v701, 4294901760
        %725 = vmatpush.msra.mxu0 %v724
        %v726 = vand.u32 %v700, 4294901760
        %727 = vmatpush.msra.mxu0 %v726
        %v728 = vand.u32 %v699, 4294901760
        %729 = vmatpush.msra.mxu0 %v728
        %v730 = vand.u32 %v698, 4294901760
        %731 = vmatpush.msra.mxu0 %v730
        %v732 = vand.u32 %v697, 4294901760
        %733 = vmatpush.msra.mxu0 %v732
        %v734 = vand.u32 %v696, 4294901760
        %735 = vmatpush.msra.mxu0 %v734
        %v736 = vand.u32 %v695, 4294901760
        %737 = vmatpush.msra.mxu0 %v736
        %v738 = vand.u32 %v694, 4294901760
        %739 = vmatpush.msra.mxu0 %v738
        %v740 = vand.u32 %v693, 4294901760
        %741 = vmatpush.msra.mxu0 %v740
        %v742 = vand.u32 %v692, 4294901760
        %743 = vmatpush.msra.mxu0 %v742
        %v744 = vand.u32 %v691, 4294901760
        %v745 = vsub.f32 %v691, %v744
        %v746 = vand.u32 %v745, 4294901760
        %v747 = vsub.f32 %v745, %v746
        %v748 = vand.u32 %v747, 4294901760
        %749 = vmatmul.f32.gmra.mxu0 %v748
        %v750 = vpop.f32.mrf.mxu0
        %v751 = vadd.f32 %v710, %v750
        %752 = vdwg.mxu0
        %v753 = vand.u32 %v707, 4294901760
        %v754 = vsub.f32 %v707, %v753
        %v755 = vand.u32 %v754, 4294901760
        %v756 = vsub.f32 %v754, %v755
        %v757 = vand.u32 %v756, 4294901760
        %758 = vmatpush.msra.mxu0 %v757
        %v759 = vand.u32 %v706, 4294901760
        %v760 = vsub.f32 %v706, %v759
        %v761 = vand.u32 %v760, 4294901760
        %v762 = vsub.f32 %v760, %v761
        %v763 = vand.u32 %v762, 4294901760
        %764 = vmatpush.msra.mxu0 %v763
        %v765 = vand.u32 %v705, 4294901760
        %v766 = vsub.f32 %v705, %v765
        %v767 = vand.u32 %v766, 4294901760
        %v768 = vsub.f32 %v766, %v767
        %v769 = vand.u32 %v768, 4294901760
        %770 = vmatpush.msra.mxu0 %v769
        %v771 = vand.u32 %v704, 4294901760
        %v772 = vsub.f32 %v704, %v771
        %v773 = vand.u32 %v772, 4294901760
        %v774 = vsub.f32 %v772, %v773
        %v775 = vand.u32 %v774, 4294901760
        %776 = vmatpush.msra.mxu0 %v775
        %v777 = vand.u32 %v703, 4294901760
        %v778 = vsub.f32 %v703, %v777
        %v779 = vand.u32 %v778, 4294901760
        %v780 = vsub.f32 %v778, %v779
        %v781 = vand.u32 %v780, 4294901760
        %782 = vmatpush.msra.mxu0 %v781
        %v783 = vand.u32 %v702, 4294901760
        %v784 = vsub.f32 %v702, %v783
        %v785 = vand.u32 %v784, 4294901760
        %v786 = vsub.f32 %v784, %v785
        %v787 = vand.u32 %v786, 4294901760
        %788 = vmatpush.msra.mxu0 %v787
        %v789 = vand.u32 %v701, 4294901760
        %v790 = vsub.f32 %v701, %v789
        %v791 = vand.u32 %v790, 4294901760
        %v792 = vsub.f32 %v790, %v791
        %v793 = vand.u32 %v792, 4294901760
        %794 = vmatpush.msra.mxu0 %v793
        %v795 = vand.u32 %v700, 4294901760
        %v796 = vsub.f32 %v700, %v795
        %v797 = vand.u32 %v796, 4294901760
        %v798 = vsub.f32 %v796, %v797
        %v799 = vand.u32 %v798, 4294901760
        %800 = vmatpush.msra.mxu0 %v799
        %v801 = vand.u32 %v699, 4294901760
        %v802 = vsub.f32 %v699, %v801
        %v803 = vand.u32 %v802, 4294901760
        %v804 = vsub.f32 %v802, %v803
        %v805 = vand.u32 %v804, 4294901760
        %806 = vmatpush.msra.mxu0 %v805
        %v807 = vand.u32 %v698, 4294901760
        %v808 = vsub.f32 %v698, %v807
        %v809 = vand.u32 %v808, 4294901760
        %v810 = vsub.f32 %v808, %v809
        %v811 = vand.u32 %v810, 4294901760
        %812 = vmatpush.msra.mxu0 %v811
        %v813 = vand.u32 %v697, 4294901760
        %v814 = vsub.f32 %v697, %v813
        %v815 = vand.u32 %v814, 4294901760
        %v816 = vsub.f32 %v814, %v815
        %v817 = vand.u32 %v816, 4294901760
        %818 = vmatpush.msra.mxu0 %v817
        %v819 = vand.u32 %v696, 4294901760
        %v820 = vsub.f32 %v696, %v819
        %v821 = vand.u32 %v820, 4294901760
        %v822 = vsub.f32 %v820, %v821
        %v823 = vand.u32 %v822, 4294901760
        %824 = vmatpush.msra.mxu0 %v823
        %v825 = vand.u32 %v695, 4294901760
        %v826 = vsub.f32 %v695, %v825
        %v827 = vand.u32 %v826, 4294901760
        %v828 = vsub.f32 %v826, %v827
        %v829 = vand.u32 %v828, 4294901760
        %830 = vmatpush.msra.mxu0 %v829
        %v831 = vand.u32 %v694, 4294901760
        %v832 = vsub.f32 %v694, %v831
        %v833 = vand.u32 %v832, 4294901760
        %v834 = vsub.f32 %v832, %v833
        %v835 = vand.u32 %v834, 4294901760
        %836 = vmatpush.msra.mxu0 %v835
        %v837 = vand.u32 %v693, 4294901760
        %v838 = vsub.f32 %v693, %v837
        %v839 = vand.u32 %v838, 4294901760
        %v840 = vsub.f32 %v838, %v839
        %v841 = vand.u32 %v840, 4294901760
        %842 = vmatpush.msra.mxu0 %v841
        %v843 = vand.u32 %v692, 4294901760
        %v844 = vsub.f32 %v692, %v843
        %v845 = vand.u32 %v844, 4294901760
        %v846 = vsub.f32 %v844, %v845
        %v847 = vand.u32 %v846, 4294901760
        %848 = vmatpush.msra.mxu0 %v847
        %v849 = vand.u32 %v691, 4294901760
        %850 = vmatmul.f32.gmra.mxu0 %v849
        %v851 = vpop.f32.mrf.mxu0
        %v852 = vadd.f32 %v751, %v851
        %853 = vdwg.mxu0
        %v854 = vand.u32 %v707, 4294901760
        %v855 = vsub.f32 %v707, %v854
        %856 = vmatpush.msra.mxu0 %v855
        %v857 = vand.u32 %v706, 4294901760
        %v858 = vsub.f32 %v706, %v857
        %859 = vmatpush.msra.mxu0 %v858
        %v860 = vand.u32 %v705, 4294901760
        %v861 = vsub.f32 %v705, %v860
        %862 = vmatpush.msra.mxu0 %v861
        %v863 = vand.u32 %v704, 4294901760
        %v864 = vsub.f32 %v704, %v863
        %865 = vmatpush.msra.mxu0 %v864
        %v866 = vand.u32 %v703, 4294901760
        %v867 = vsub.f32 %v703, %v866
        %868 = vmatpush.msra.mxu0 %v867
        %v869 = vand.u32 %v702, 4294901760
        %v870 = vsub.f32 %v702, %v869
        %871 = vmatpush.msra.mxu0 %v870
        %v872 = vand.u32 %v701, 4294901760
        %v873 = vsub.f32 %v701, %v872
        %874 = vmatpush.msra.mxu0 %v873
        %v875 = vand.u32 %v700, 4294901760
        %v876 = vsub.f32 %v700, %v875
        %877 = vmatpush.msra.mxu0 %v876
        %v878 = vand.u32 %v699, 4294901760
        %v879 = vsub.f32 %v699, %v878
        %880 = vmatpush.msra.mxu0 %v879
        %v881 = vand.u32 %v698, 4294901760
        %v882 = vsub.f32 %v698, %v881
        %883 = vmatpush.msra.mxu0 %v882
        %v884 = vand.u32 %v697, 4294901760
        %v885 = vsub.f32 %v697, %v884
        %886 = vmatpush.msra.mxu0 %v885
        %v887 = vand.u32 %v696, 4294901760
        %v888 = vsub.f32 %v696, %v887
        %889 = vmatpush.msra.mxu0 %v888
        %v890 = vand.u32 %v695, 4294901760
        %v891 = vsub.f32 %v695, %v890
        %892 = vmatpush.msra.mxu0 %v891
        %v893 = vand.u32 %v694, 4294901760
        %v894 = vsub.f32 %v694, %v893
        %895 = vmatpush.msra.mxu0 %v894
        %v896 = vand.u32 %v693, 4294901760
        %v897 = vsub.f32 %v693, %v896
        %898 = vmatpush.msra.mxu0 %v897
        %v899 = vand.u32 %v692, 4294901760
        %v900 = vsub.f32 %v692, %v899
        %901 = vmatpush.msra.mxu0 %v900
        %v902 = vand.u32 %v691, 4294901760
        %v903 = vsub.f32 %v691, %v902
        %904 = vmatmul.f32.gmra.mxu0 %v903
        %v905 = vpop.f32.mrf.mxu0
        %v906 = vadd.f32 %v852, %v905
        %907 = vdwg.mxu0
        %v908 = vand.u32 %v707, 4294901760
        %909 = vmatpush.msra.mxu0 %v908
        %v910 = vand.u32 %v706, 4294901760
        %911 = vmatpush.msra.mxu0 %v910
        %v912 = vand.u32 %v705, 4294901760
        %913 = vmatpush.msra.mxu0 %v912
        %v914 = vand.u32 %v704, 4294901760
        %915 = vmatpush.msra.mxu0 %v914
        %v916 = vand.u32 %v703, 4294901760
        %917 = vmatpush.msra.mxu0 %v916
        %v918 = vand.u32 %v702, 4294901760
        %919 = vmatpush.msra.mxu0 %v918
        %v920 = vand.u32 %v701, 4294901760
        %921 = vmatpush.msra.mxu0 %v920
        %v922 = vand.u32 %v700, 4294901760
        %923 = vmatpush.msra.mxu0 %v922
        %v924 = vand.u32 %v699, 4294901760
        %925 = vmatpush.msra.mxu0 %v924
        %v926 = vand.u32 %v698, 4294901760
        %927 = vmatpush.msra.mxu0 %v926
        %v928 = vand.u32 %v697, 4294901760
        %929 = vmatpush.msra.mxu0 %v928
        %v930 = vand.u32 %v696, 4294901760
        %931 = vmatpush.msra.mxu0 %v930
        %v932 = vand.u32 %v695, 4294901760
        %933 = vmatpush.msra.mxu0 %v932
        %v934 = vand.u32 %v694, 4294901760
        %935 = vmatpush.msra.mxu0 %v934
        %v936 = vand.u32 %v693, 4294901760
        %937 = vmatpush.msra.mxu0 %v936
        %v938 = vand.u32 %v692, 4294901760
        %939 = vmatpush.msra.mxu0 %v938
        %v940 = vand.u32 %v691, 4294901760
        %v941 = vsub.f32 %v691, %v940
        %v942 = vand.u32 %v941, 4294901760
        %943 = vmatmul.f32.gmra.mxu0 %v942
        %v944 = vpop.f32.mrf.mxu0
        %v945 = vadd.f32 %v906, %v944
        %946 = vdwg.mxu0
        %v947 = vand.u32 %v707, 4294901760
        %v948 = vsub.f32 %v707, %v947
        %v949 = vand.u32 %v948, 4294901760
        %950 = vmatpush.msra.mxu0 %v949
        %v951 = vand.u32 %v706, 4294901760
        %v952 = vsub.f32 %v706, %v951
        %v953 = vand.u32 %v952, 4294901760
        %954 = vmatpush.msra.mxu0 %v953
        %v955 = vand.u32 %v705, 4294901760
        %v956 = vsub.f32 %v705, %v955
        %v957 = vand.u32 %v956, 4294901760
        %958 = vmatpush.msra.mxu0 %v957
        %v959 = vand.u32 %v704, 4294901760
        %v960 = vsub.f32 %v704, %v959
        %v961 = vand.u32 %v960, 4294901760
        %962 = vmatpush.msra.mxu0 %v961
        %v963 = vand.u32 %v703, 4294901760
        %v964 = vsub.f32 %v703, %v963
        %v965 = vand.u32 %v964, 4294901760
        %966 = vmatpush.msra.mxu0 %v965
        %v967 = vand.u32 %v702, 4294901760
        %v968 = vsub.f32 %v702, %v967
        %v969 = vand.u32 %v968, 4294901760
        %970 = vmatpush.msra.mxu0 %v969
        %v971 = vand.u32 %v701, 4294901760
        %v972 = vsub.f32 %v701, %v971
        %v973 = vand.u32 %v972, 4294901760
        %974 = vmatpush.msra.mxu0 %v973
        %v975 = vand.u32 %v700, 4294901760
        %v976 = vsub.f32 %v700, %v975
        %v977 = vand.u32 %v976, 4294901760
        %978 = vmatpush.msra.mxu0 %v977
        %v979 = vand.u32 %v699, 4294901760
        %v980 = vsub.f32 %v699, %v979
        %v981 = vand.u32 %v980, 4294901760
        %982 = vmatpush.msra.mxu0 %v981
        %v983 = vand.u32 %v698, 4294901760
        %v984 = vsub.f32 %v698, %v983
        %v985 = vand.u32 %v984, 4294901760
        %986 = vmatpush.msra.mxu0 %v985
        %v987 = vand.u32 %v697, 4294901760
        %v988 = vsub.f32 %v697, %v987
        %v989 = vand.u32 %v988, 4294901760
        %990 = vmatpush.msra.mxu0 %v989
        %v991 = vand.u32 %v696, 4294901760
        %v992 = vsub.f32 %v696, %v991
        %v993 = vand.u32 %v992, 4294901760
        %994 = vmatpush.msra.mxu0 %v993
        %v995 = vand.u32 %v695, 4294901760
        %v996 = vsub.f32 %v695, %v995
        %v997 = vand.u32 %v996, 4294901760
        %998 = vmatpush.msra.mxu0 %v997
        %v999 = vand.u32 %v694, 4294901760
        %v1000 = vsub.f32 %v694, %v999
        %v1001 = vand.u32 %v1000, 4294901760
        %1002 = vmatpush.msra.mxu0 %v1001
        %v1003 = vand.u32 %v693, 4294901760
        %v1004 = vsub.f32 %v693, %v1003
        %v1005 = vand.u32 %v1004, 4294901760
        %1006 = vmatpush.msra.mxu0 %v1005
        %v1007 = vand.u32 %v692, 4294901760
        %v1008 = vsub.f32 %v692, %v1007
        %v1009 = vand.u32 %v1008, 4294901760
        %1010 = vmatpush.msra.mxu0 %v1009
        %v1011 = vand.u32 %v691, 4294901760
        %1012 = vmatmul.f32.gmra.mxu0 %v1011
        %v1013 = vpop.f32.mrf.mxu0
        %v1014 = vadd.f32 %v945, %v1013
        %1015 = vdwg.mxu0
        %v1016 = vand.u32 %v707, 4294901760
        %1017 = vmatpush.msra.mxu0 %v1016
        %v1018 = vand.u32 %v706, 4294901760
        %1019 = vmatpush.msra.mxu0 %v1018
        %v1020 = vand.u32 %v705, 4294901760
        %1021 = vmatpush.msra.mxu0 %v1020
        %v1022 = vand.u32 %v704, 4294901760
        %1023 = vmatpush.msra.mxu0 %v1022
        %v1024 = vand.u32 %v703, 4294901760
        %1025 = vmatpush.msra.mxu0 %v1024
        %v1026 = vand.u32 %v702, 4294901760
        %1027 = vmatpush.msra.mxu0 %v1026
        %v1028 = vand.u32 %v701, 4294901760
        %1029 = vmatpush.msra.mxu0 %v1028
        %v1030 = vand.u32 %v700, 4294901760
        %1031 = vmatpush.msra.mxu0 %v1030
        %v1032 = vand.u32 %v699, 4294901760
        %1033 = vmatpush.msra.mxu0 %v1032
        %v1034 = vand.u32 %v698, 4294901760
        %1035 = vmatpush.msra.mxu0 %v1034
        %v1036 = vand.u32 %v697, 4294901760
        %1037 = vmatpush.msra.mxu0 %v1036
        %v1038 = vand.u32 %v696, 4294901760
        %1039 = vmatpush.msra.mxu0 %v1038
        %v1040 = vand.u32 %v695, 4294901760
        %1041 = vmatpush.msra.mxu0 %v1040
        %v1042 = vand.u32 %v694, 4294901760
        %1043 = vmatpush.msra.mxu0 %v1042
        %v1044 = vand.u32 %v693, 4294901760
        %1045 = vmatpush.msra.mxu0 %v1044
        %v1046 = vand.u32 %v692, 4294901760
        %1047 = vmatpush.msra.mxu0 %v1046
        %v1048 = vand.u32 %v691, 4294901760
        %1049 = vmatmul.f32.gmra.mxu0 %v1048
        %v1050 = vpop.f32.mrf.mxu0
        %v1051 = vadd.f32 %v1014, %v1050
        %1052 = vdwg.mxu0
        %v1053 = vadd.f32 %v1051, %v329
        %v1054 = vld [vmem:[%s5] sm:$0x1]
        %v1055 = vld [vmem:[%s6] sm:$0x1]
        %1056 = vadd.xlane.f32.xlu0 %v1053
        %v1057 = vpop.xlane.xlu0 %1056
        %v1058 = vmul.f32 %v1057, 0.03125
        %v1059 = vlaneseq
        %v1060 = vand.u32 %v1059, 127
        %vm1061 = vcmp.lt.s32.totalorder %v1060, 32
        %v1062 = vsub.f32 %v1053, %v1058
        %v1063 = vsel %vm1061, %v1062, 0.0
        %v1064 = vmul.f32 %v1063, %v1063
        %1065 = vadd.xlane.f32.xlu0 %v1064
        %v1066 = vpop.xlane.xlu0 %1065
        %v1067 = vmul.f32 %v1066, 0.03125
        %v1068 = vadd.f32 %v1067, 1e-06
        %v1069 = vrsqrt.pop %v1068
        %v1070 = vmul.f32 %v1069, %v1068
        %v1071 = vmul.f32 %v1070, %v1069
        %v1072 = vmul.f32 0.5, %v1071
        %v1073 = vsub.f32 1.5, %v1072
        %v1074 = vmul.f32 %v1069, %v1073
        %vm1075 = vweird.f32 %v1068
        %vm1076 = vweird.f32 %v1069
        %vm1077 = vmor %vm1075, %vm1076
        %v1078 = vsel %vm1077, %v1069, %v1074
        %v1079 = vmul.f32 %v1063, %v1078
        %v1081 = vperm.slane %v1054, 0
        %v1083 = vmul.f32 %v1079, %v1081
        %v1085 = vperm.slane %v1055, 0
        %v1087 = vadd.f32 %v1083, %v1085
        %1088 = vst [vmem:[%s328] sm:$0xff] %v1087
        %s1089 = sand.u32 %s185, 1
        %s1090 = scalar_lea.sflag [#allocation4], %s1089
        %s1091 = sand.u32 %s185, 1
        %s1092 = smul.addr %s1091, 8
        %s1093 = scalar_lea.vmem [#allocation8], %s1092
        // Predicated region
        $region61: #{tpu_custom_call.1} parent=47 // pred_check
          %p1094 = pneg %p195
        $region62: #{tpu_custom_call.1} parent=47 // pred_check_branch
          %1096 = sbr.rel (%p1094) target = $region64
        $region63: #{tpu_custom_call.1} parent=47 // pred_region
          %1098 = vsyncadd %s1090, 0
          %s1099 = smul.addr %s25, 8
          %s1100 = scalar_lea.hbm %s7, %s1099
          %s1102 = sshll.u32 %s1093, 4
          %s1103 = int_to_ptr.vmem [resolvable:$true] %s1102
          %s1104 = sshll.u32 %s1100, 4
          %s1105 = int_to_ptr.hbm [resolvable:$true] %s1104
          %1107 = dma.vmem_to_hbm [thread:$0]  %s1103, 128, %s1105, %s1090
        $region64: #{tpu_custom_call.1} parent=47 // pred_fallthru
          _
      $region48: #{tpu_custom_call.1} parent=5 // pred_fallthru
        _
      %p1108 = scmp.le.s32.totalorder 2, %s20
      // Predicated region
      $region65: #{tpu_custom_call.1} parent=5 // pred_check
        %p1109 = pneg %p1108
      $region66: #{tpu_custom_call.1} parent=5 // pred_check_branch
        %1111 = sbr.rel (%p1109) target = $region68
      $region67: #{tpu_custom_call.1} parent=5 // pred_region
        %s1112 = ssub.s32 %s20, 2
        // Predicated region
        $region69: #{tpu_custom_call.1} parent=67 // pred_check
          %p1113 = pneg %p201
        $region70: #{tpu_custom_call.1} parent=67 // pred_check_branch
          %1115 = sbr.rel (%p1113) target = $region72
        $region71: #{tpu_custom_call.1} parent=67 // pred_region
          %s1116 = sand.u32 %s186, 1
          %s1117 = scalar_lea.sflag [#allocation4], %s1116
          %s1118 = sand.u32 %s186, 1
          %s1119 = smul.addr %s1118, 8
          %s1120 = scalar_lea.vmem [#allocation8], %s1119
          %1122 = dma.done %s1117, 128
        $region72: #{tpu_custom_call.1} parent=67 // pred_fallthru
          _
      $region68: #{tpu_custom_call.1} parent=5 // pred_fallthru
        _
    $region6: #{tpu_custom_call.1} parent=1 // loop_footer
      %s24 = sadd.s32 1, %s20
    $region7: #{tpu_custom_call.1} parent=1 // loop_footer_branch
      %19 = sbr.rel target = $region3
    $region8: #{tpu_custom_call.1} parent=1 // loop_exit
      _
    %1123 = vsyncpa [#allocation3], 1
    %s1124 = scalar_lea.sflag [#allocation3], 1
    %1125 = vsyncpa %s1124, 1
    %1126 = vsyncpa [#allocation6], 1
    %1127 = vsyncpa [#allocation4], 1
    %s1128 = scalar_lea.sflag [#allocation4], 1
    %1129 = vsyncpa %s1128, 1

</llo_original>
